<compile_context>
chip_gen: v5e
topology: v5e:2x2
jax: 0.10.0
libtpu: 0.0.40
codegen_flags: <defaults>
</compile_context>

<pallas_src>
import numpy as np
import jax
import jax.numpy as jnp
from jax.experimental import pallas as pl
from jax.experimental.pallas import tpu as pltpu


_VMEM_LIMIT = 48 * 1024 * 1024  # > default scoped limit everywhere, < 64 MiB physical on v7x
_BLOCK_TARGET = 2 * 1024 * 1024  # ~2 MiB per input block


def _largest_divisor(n, cap, multiple_of=1):
    """Largest d with d | n, d <= cap, multiple_of | d (None if no such d)."""
    best = None
    for d in range(1, min(n, cap) + 1):
        if n % d == 0 and d % multiple_of == 0:
            best = d
    return best


# --------------------------------------------------------------------------
# Fused path: in-kernel parity split + MXU column deinterleave.
# --------------------------------------------------------------------------
def _haar_col_matrix(w):
    """(W, W) matrix: cols [:Wo] = column-pair sums, cols [Wo:] = (odd - even)."""
    wo = w // 2
    m = np.zeros((w, w), np.float32)
    k = np.arange(wo)
    m[2 * k, k] = 1.0
    m[2 * k + 1, k] = 1.0
    m[2 * k, wo + k] = -1.0
    m[2 * k + 1, wo + k] = 1.0
    return jnp.asarray(m, dtype=jnp.bfloat16)  # 0/+-1 are exact in bf16


def _dwt_fused_kernel(x_ref, m_ref, o_ref):
    # x_ref: (tile_c, tile_h, 2*W)  -- even input rows in lanes [:W], odd in [W:]
    # m_ref: (W, W) bf16 Haar column matrix
    # o_ref: (4, tile_c, tile_h, Wo) -- bands LL, HL, LH, HH
    tile_c, _, w2 = x_ref.shape
    w = w2 // 2
    wo = w // 2
    m = m_ref[...]
    out_dtype = o_ref.dtype

    def haar_cols(v):
        # f32-faithful (v @ m) on the bf16 MXU via a 3-way bf16 split of v.
        hi = v.astype(jnp.bfloat16)
        r = v - hi.astype(jnp.float32)
        mid = r.astype(jnp.bfloat16)
        lo = (r - mid.astype(jnp.float32)).astype(jnp.bfloat16)
        acc = jnp.dot(hi, m, preferred_element_type=jnp.float32)
        acc = acc + jnp.dot(mid, m, preferred_element_type=jnp.float32)
        acc = acc + jnp.dot(lo, m, preferred_element_type=jnp.float32)
        return acc

    for c in range(tile_c):  # static unroll; tile_c kept small (<= 8)
        x_even = x_ref[c, :, :w].astype(jnp.float32)   # even input rows
        x_odd = x_ref[c, :, w:].astype(jnp.float32)    # odd input rows
        y_even = haar_cols(x_even)                     # [:, :wo]=Es, [:, wo:]=Ed
        y_odd = haar_cols(x_odd)                       # [:, :wo]=Os, [:, wo:]=Od
        es, ed = y_even[:, :wo], y_even[:, wo:]
        os_, od = y_odd[:, :wo], y_odd[:, wo:]
        o_ref[0, c] = ((es + os_) * 0.5).astype(out_dtype)   # LL
        o_ref[1, c] = ((ed + od) * 0.5).astype(out_dtype)    # HL
        o_ref[2, c] = ((os_ - es) * 0.5).astype(out_dtype)   # LH
        o_ref[3, c] = ((od - ed) * 0.5).astype(out_dtype)    # HH


def _dwt_fused(x):
    """Returns (B, 4*C, Ho, Wo) or None if this path does not apply cleanly."""
    B, C, H, W = x.shape
    Ho, Wo = H // 2, W // 2
    itemsize = jnp.dtype(x.dtype).itemsize
    sub_mult = max(8, 32 // itemsize)        # native sublane packing: f32 8, bf16 16, int8 32
    row_bytes = 2 * W * itemsize             # one (2W)-wide row of the reshaped input

    # Rows per block: big enough to amortize MXU weight pushes and per-step
    # overhead, capped to bound vreg/VMEM spill pressure.
    max_rows = min(Ho, 512, max(sub_mult, _BLOCK_TARGET // row_bytes))
    if Ho <= max_rows:
        tile_h = Ho
    else:
        tile_h = _largest_divisor(Ho, max_rows, multiple_of=sub_mult)
    if tile_h is None:
        return None  # awkward Ho; the band-stacked fallback handles it

    c_cap = max(1, min(8, _BLOCK_TARGET // max(1, tile_h * row_bytes)))
    tile_c = _largest_divisor(C, c_cap) or 1

    x2 = x.reshape(B, C, Ho, 2 * W)          # free reshape: row-pair k -> one 2W row
    m = _haar_col_matrix(W)

    grid = (B, C // tile_c, Ho // tile_h)
    out5 = pl.pallas_call(
        _dwt_fused_kernel,
        out_shape=jax.ShapeDtypeStruct((B, 4, C, Ho, Wo), x.dtype),
        grid=grid,
        in_specs=[
            pl.BlockSpec((None, tile_c, tile_h, 2 * W),
                         lambda b, ci, hi: (b, ci, hi, 0)),
            pl.BlockSpec((W, W), lambda b, ci, hi: (0, 0)),  # resident constant
        ],
        out_specs=pl.BlockSpec((None, 4, tile_c, tile_h, Wo),
                               lambda b, ci, hi: (b, 0, ci, hi, 0)),
        compiler_params=pltpu.CompilerParams(
            dimension_semantics=("parallel", "parallel", "parallel"),
            vmem_limit_bytes=_VMEM_LIMIT),
        cost_estimate=pl.CostEstimate(
            flops=16 * B * C * Ho * Wo,
            transcendentals=0,
            bytes_accessed=2 * B * C * H * W * itemsize),
    )(x2, m)
    return out5.reshape(B, 4 * C, Ho, Wo)   # contiguous, free


# --------------------------------------------------------------------------
# Band-stacked fallback: one XLA transpose + lane-folded butterfly kernel.
# --------------------------------------------------------------------------
def _dwt_bandstack_kernel(x_ref, o_ref):
    # x_ref / o_ref: (1, 4, tile_c, tile_s); band j = 2*row_parity + col_parity
    u1 = x_ref[0, 0].astype(jnp.float32)  # even row, even col
    u3 = x_ref[0, 1].astype(jnp.float32)  # even row, odd col
    u2 = x_ref[0, 2].astype(jnp.float32)  # odd  row, even col
    u4 = x_ref[0, 3].astype(jnp.float32)  # odd  row, odd col

    a = u1 + u2
    b = u3 + u4
    c = u2 - u1
    d = u4 - u3

    out_dtype = o_ref.dtype
    o_ref[0, 0] = ((a + b) * 0.5).astype(out_dtype)  # LL
    o_ref[0, 1] = ((b - a) * 0.5).astype(out_dtype)  # HL
    o_ref[0, 2] = ((c + d) * 0.5).astype(out_dtype)  # LH
    o_ref[0, 3] = ((d - c) * 0.5).astype(out_dtype)  # HH


def _dwt_bandstack(x, *, tile_s_cap=8192, tile_c_cap=8):
    B, C, H, W = x.shape
    Ho, Wo = H // 2, W // 2
    S = Ho * Wo
    itemsize = jnp.dtype(x.dtype).itemsize
    sub_mult = max(8, 32 // itemsize)
    tile_c_cap = max(tile_c_cap, sub_mult)

    # Band-stack the 2x2 parities (the only non-kernel data movement on this path).
    xp = (x.reshape(B, C, Ho, 2, Wo, 2)
           .transpose(0, 3, 5, 1, 2, 4)      # (b, row_par, col_par, c, ho, wo)
           .reshape(B, 4, C, S))

    tile_c = C if C <= tile_c_cap else tile_c_cap   # cap is a multiple of the sublane packing
    tile_s = S if S <= tile_s_cap else tile_s_cap   # cap is a multiple of 128

    grid = (B, pl.cdiv(C, tile_c), pl.cdiv(S, tile_s))
    blk = (1, 4, tile_c, tile_s)
    idx = lambda b, ci, si: (b, 0, ci, si)

    out = pl.pallas_call(
        _dwt_bandstack_kernel,
        out_shape=jax.ShapeDtypeStruct((B, 4, C, S), x.dtype),
        grid=grid,
        in_specs=[pl.BlockSpec(blk, idx)],
        out_specs=pl.BlockSpec(blk, idx),
        compiler_params=pltpu.CompilerParams(
            dimension_semantics=("parallel", "parallel", "parallel"),
            vmem_limit_bytes=_VMEM_LIMIT),
        cost_estimate=pl.CostEstimate(
            flops=16 * B * C * S,
            transcendentals=0,
            bytes_accessed=4 * B * C * H * W * itemsize),
    )(xp)
    return out.reshape(B, 4 * C, Ho, Wo)    # contiguous, free


# --------------------------------------------------------------------------
# Public entry point.
# --------------------------------------------------------------------------
def dwt(x):
    """Haar wavelet downsampling: (B, C, H, W) -> (B, 4*C, H//2, W//2)."""
    B, C, H, W = x.shape
    assert H % 2 == 0 and W % 2 == 0, "DWT requires even spatial dims"

    if W % 256 == 0 and W <= 1024:
        out = _dwt_fused(x)
        if out is not None:
            return out
    # TODO(synk): for W > 1024 or widths that are not multiples of 256 the
    # column deinterleave is not folded in; we fall back to one XLA band-stack
    # transpose feeding the lane-folded butterfly kernel.
    return _dwt_bandstack(x)


def _dwt_ref(x):
    """Pure-JAX reference mirroring the PyTorch dwt_init."""
    x01 = x[:, :, 0::2, :] / 2
    x02 = x[:, :, 1::2, :] / 2
    x1 = x01[:, :, :, 0::2]
    x2 = x02[:, :, :, 0::2]
    x3 = x01[:, :, :, 1::2]
    x4 = x02[:, :, :, 1::2]
    x_LL = x1 + x2 + x3 + x4
    x_HL = -x1 - x2 + x3 + x4
    x_LH = -x1 + x2 - x3 + x4
    x_HH = x1 - x2 - x3 + x4
    return jnp.concatenate((x_LL, x_HL, x_LH, x_HH), axis=1)


if __name__ == "__main__":
    key = jax.random.PRNGKey(0)
    k1, k2 = jax.random.split(key)

    dwt_fn = jax.jit(dwt)

    # Small case (band-stacked fallback path; tiny feature map, Wo < 128).
    x_small = jax.random.normal(k1, (2, 4, 16, 16), dtype=jnp.float32)
    out_small = jax.block_until_ready(dwt_fn(x_small))
    assert out_small.shape == (2, 16, 8, 8), out_small.shape
    assert jnp.allclose(out_small, _dwt_ref(x_small), atol=1e-5, rtol=1e-5), \
        "small-path mismatch vs reference"

    # Wider case (fused path: in-kernel parity split + MXU column deinterleave),
    # with a non-trivial (batch x channel-tile) grid.
    x_wide = jax.random.normal(k2, (2, 16, 16, 256), dtype=jnp.float32)
    out_wide = jax.block_until_ready(dwt_fn(x_wide))
    assert out_wide.shape == (2, 64, 8, 128), out_wide.shape
    assert jnp.allclose(out_wide, _dwt_ref(x_wide), atol=1e-5, rtol=1e-5), \
        "fused-path mismatch vs reference"

    print("KERNEL_OK")
</pallas_src>

<mosaic_0001>
module attributes {stable_mosaic.version = 11 : i64} {
  func.func @_dwt_bandstack_kernel(%arg0: i32, %arg1: i32, %arg2: i32, %arg3: memref<1x4x4x64xf32, #tpu.memory_space<vmem>>, %arg4: memref<1x4x4x64xf32, #tpu.memory_space<vmem>>) attributes {dimension_semantics = [#tpu.dimension_semantics<parallel>, #tpu.dimension_semantics<parallel>, #tpu.dimension_semantics<parallel>], iteration_bounds = array<i64: 2, 1, 1>, scalar_prefetch = 0 : i64, scratch_operands = 0 : i64, tpu.core_type = #tpu.core_type<tc>, window_params = [{transform_indices = @transform_0, window_bounds = array<i64: 1, 4, 4, 64>}, {transform_indices = @transform_1, window_bounds = array<i64: 1, 4, 4, 64>}]} {
    %c0 = arith.constant 0 : index
    %c0_0 = arith.constant 0 : index
    %c0_1 = arith.constant 0 : index
    %c0_2 = arith.constant 0 : index
    %0 = vector.load %arg3[%c0, %c0_0, %c0_1, %c0_2] : memref<1x4x4x64xf32, #tpu.memory_space<vmem>>, vector<1x1x4x64xf32>
    %1 = vector.shape_cast %0 : vector<1x1x4x64xf32> to vector<4x64xf32>
    %c0_3 = arith.constant 0 : index
    %c1 = arith.constant 1 : index
    %c0_4 = arith.constant 0 : index
    %c0_5 = arith.constant 0 : index
    %2 = vector.load %arg3[%c0_3, %c1, %c0_4, %c0_5] : memref<1x4x4x64xf32, #tpu.memory_space<vmem>>, vector<1x1x4x64xf32>
    %3 = vector.shape_cast %2 : vector<1x1x4x64xf32> to vector<4x64xf32>
    %c0_6 = arith.constant 0 : index
    %c2 = arith.constant 2 : index
    %c0_7 = arith.constant 0 : index
    %c0_8 = arith.constant 0 : index
    %4 = vector.load %arg3[%c0_6, %c2, %c0_7, %c0_8] : memref<1x4x4x64xf32, #tpu.memory_space<vmem>>, vector<1x1x4x64xf32>
    %5 = vector.shape_cast %4 : vector<1x1x4x64xf32> to vector<4x64xf32>
    %c0_9 = arith.constant 0 : index
    %c3 = arith.constant 3 : index
    %c0_10 = arith.constant 0 : index
    %c0_11 = arith.constant 0 : index
    %6 = vector.load %arg3[%c0_9, %c3, %c0_10, %c0_11] : memref<1x4x4x64xf32, #tpu.memory_space<vmem>>, vector<1x1x4x64xf32>
    %7 = vector.shape_cast %6 : vector<1x1x4x64xf32> to vector<4x64xf32>
    %8 = arith.addf %1, %5 : vector<4x64xf32>
    %9 = arith.addf %3, %7 : vector<4x64xf32>
    %10 = arith.subf %5, %1 : vector<4x64xf32>
    %11 = arith.subf %7, %3 : vector<4x64xf32>
    %12 = arith.addf %8, %9 : vector<4x64xf32>
    %cst = arith.constant 5.000000e-01 : f32
    %13 = vector.broadcast %cst : f32 to vector<4x64xf32>
    %14 = arith.mulf %12, %13 : vector<4x64xf32>
    %c0_12 = arith.constant 0 : index
    %c0_13 = arith.constant 0 : index
    %c0_14 = arith.constant 0 : index
    %c0_15 = arith.constant 0 : index
    %15 = vector.load %arg4[%c0_12, %c0_13, %c0_14, %c0_15] : memref<1x4x4x64xf32, #tpu.memory_space<vmem>>, vector<1x1x4x64xf32>
    %16 = vector.shape_cast %15 : vector<1x1x4x64xf32> to vector<4x64xf32>
    %17 = vector.shape_cast %14 : vector<4x64xf32> to vector<1x1x4x64xf32>
    tpu.vector_store %arg4[%c0_12, %c0_13, %c0_14, %c0_15], %17 {strides = array<i32>} : memref<1x4x4x64xf32, #tpu.memory_space<vmem>>, vector<1x1x4x64xf32>,
    %18 = arith.subf %9, %8 : vector<4x64xf32>
    %cst_16 = arith.constant 5.000000e-01 : f32
    %19 = vector.broadcast %cst_16 : f32 to vector<4x64xf32>
    %20 = arith.mulf %18, %19 : vector<4x64xf32>
    %c0_17 = arith.constant 0 : index
    %c1_18 = arith.constant 1 : index
    %c0_19 = arith.constant 0 : index
    %c0_20 = arith.constant 0 : index
    %21 = vector.load %arg4[%c0_17, %c1_18, %c0_19, %c0_20] : memref<1x4x4x64xf32, #tpu.memory_space<vmem>>, vector<1x1x4x64xf32>
    %22 = vector.shape_cast %21 : vector<1x1x4x64xf32> to vector<4x64xf32>
    %23 = vector.shape_cast %20 : vector<4x64xf32> to vector<1x1x4x64xf32>
    tpu.vector_store %arg4[%c0_17, %c1_18, %c0_19, %c0_20], %23 {strides = array<i32>} : memref<1x4x4x64xf32, #tpu.memory_space<vmem>>, vector<1x1x4x64xf32>,
    %24 = arith.addf %10, %11 : vector<4x64xf32>
    %cst_21 = arith.constant 5.000000e-01 : f32
    %25 = vector.broadcast %cst_21 : f32 to vector<4x64xf32>
    %26 = arith.mulf %24, %25 : vector<4x64xf32>
    %c0_22 = arith.constant 0 : index
    %c2_23 = arith.constant 2 : index
    %c0_24 = arith.constant 0 : index
    %c0_25 = arith.constant 0 : index
    %27 = vector.load %arg4[%c0_22, %c2_23, %c0_24, %c0_25] : memref<1x4x4x64xf32, #tpu.memory_space<vmem>>, vector<1x1x4x64xf32>
    %28 = vector.shape_cast %27 : vector<1x1x4x64xf32> to vector<4x64xf32>
    %29 = vector.shape_cast %26 : vector<4x64xf32> to vector<1x1x4x64xf32>
    tpu.vector_store %arg4[%c0_22, %c2_23, %c0_24, %c0_25], %29 {strides = array<i32>} : memref<1x4x4x64xf32, #tpu.memory_space<vmem>>, vector<1x1x4x64xf32>,
    %30 = arith.subf %11, %10 : vector<4x64xf32>
    %cst_26 = arith.constant 5.000000e-01 : f32
    %31 = vector.broadcast %cst_26 : f32 to vector<4x64xf32>
    %32 = arith.mulf %30, %31 : vector<4x64xf32>
    %c0_27 = arith.constant 0 : index
    %c3_28 = arith.constant 3 : index
    %c0_29 = arith.constant 0 : index
    %c0_30 = arith.constant 0 : index
    %33 = vector.load %arg4[%c0_27, %c3_28, %c0_29, %c0_30] : memref<1x4x4x64xf32, #tpu.memory_space<vmem>>, vector<1x1x4x64xf32>
    %34 = vector.shape_cast %33 : vector<1x1x4x64xf32> to vector<4x64xf32>
    %35 = vector.shape_cast %32 : vector<4x64xf32> to vector<1x1x4x64xf32>
    tpu.vector_store %arg4[%c0_27, %c3_28, %c0_29, %c0_30], %35 {strides = array<i32>} : memref<1x4x4x64xf32, #tpu.memory_space<vmem>>, vector<1x1x4x64xf32>,
    return
  }
  func.func @transform_0(%arg0: i32, %arg1: i32, %arg2: i32) -> (i32, i32, i32, i32) {
    %c0_i32 = arith.constant 0 : i32
    %c0_i32_0 = arith.constant 0 : i32
    return %arg0, %c0_i32, %arg1, %arg2 : i32, i32, i32, i32
  }
  func.func @transform_1(%arg0: i32, %arg1: i32, %arg2: i32) -> (i32, i32, i32, i32) {
    %c0_i32 = arith.constant 0 : i32
    %c0_i32_0 = arith.constant 0 : i32
    return %arg0, %c0_i32, %arg1, %arg2 : i32, i32, i32, i32
  }
}

</mosaic_0001>

<llo_original>
// kernel: dwt.1
$region0: #{dwt.1}
  #allocation0 [shape = 'u32[]', space=smem, size = 0x4, offset = 0x4, fixed_abs, tag = 'smem constant byte address 0x4 - core index']
  #allocation1 [shape = 'u32[72,128]{1,0:T(1,128)}', space=vmem, size = 0x9000, scoped, tag = 'internal scratch']
  %s0 = inlined_call_operand.vmem [shape: f32[2,4,4,64], index: 0, kind: input, shape index: {}]
  %s1 = inlined_call_operand.vmem [shape: f32[2,4,4,64], index: 1, kind: output, shape index: {}]
  %s2 = sld [smem:[#allocation0]]
  $region37: #{dwt.1} parent=0
    _
  %s4 = ssub.s32 1, %s2
  %s5 = scalar_select 0, %s4, %s2
  loop: start=0, step=1, limit=4
  $region2: #{dwt.1} parent=0 // loop_pre_header
    _
  $region3: #{dwt.1} parent=0 // loop_header
    %s7 = sphi 0, %s11
    %p8 = scmp.ge.s32.totalorder %s7, 4
    %s14 = sphi 0, %s33
    %s15 = sphi 0, %s29
    %s16 = sphi 0, %s25
    %s17 = sphi 0, %s14
    %s18 = sphi 0, %s15
    %s19 = sphi 0, %s16
    %s20 = sphi 0, %s17
    %s21 = sphi 0, %s18
    %s22 = sphi 0, %s19
    %s40 = sphi 0, %s42
    %s43 = sphi 0, %s40
    %s44 = sphi 0, %s43
    %s60 = sphi 0, %s44
    %s70 = sphi 0, %s72
    %s73 = sphi 0, %s70
    %s74 = sphi 0, %s73
    %s90 = sphi 0, %s74
  $region4: #{dwt.1} parent=0 // loop_header_branch
    %10 = sbr.rel (%p8) target = $region8
  $region5: #{dwt.1} parent=0 // loop_body
    %s12 = ssub.s32 %s7, 1
    %s13 = ssub.s32 %s7, 2
    %s23 = sadd.s32 1, %s16
    %p24 = scmp.ge.s32.totalorder %s23, 1
    %s25 = scalar_select %p24, 0, %s23
    %s26 = sadd.s32 1, %s15
    %s27 = scalar_select %p24, %s26, %s15
    %p28 = scmp.ge.s32.totalorder %s27, 1
    %s29 = scalar_select %p28, 0, %s27
    %s30 = sadd.s32 1, %s14
    %s31 = scalar_select %p28, %s30, %s14
    %p32 = scmp.ge.s32.totalorder %s31, 2
    %s33 = scalar_select %p32, 0, %s31
    %s34 = ssub.s32 %s14, %s33
    %s35 = ssub.s32 %s15, %s29
    %s36 = sor.u32 %s34, %s35
    %s37 = ssub.s32 %s16, %s25
    %s38 = sor.u32 %s36, %s37
    %p39 = scmp.eq.s32.totalorder %s38, 0
    %s41 = sadd.s32 %s40, 1
    %s42 = scalar_select %p39, %s40, %s41
    %p45 = pneg %p39
    %p46 = scmp.eq.s32.totalorder %s7, 1
    %p47 = por %p45, %p46
    %p48 = scmp.ne.s32.totalorder %s40, %s43
    %p49 = scmp.eq.s32.totalorder %s7, 0
    %p50 = por %p48, %p49
    %p51 = scmp.ne.s32.totalorder %s40, %s43
    %p52 = scmp.eq.s32.totalorder %s12, 1
    %p53 = por %p51, %p52
    %p54 = scmp.ne.s32.totalorder %s43, %s44
    %p55 = scmp.eq.s32.totalorder %s12, 0
    %p56 = por %p54, %p55
    %p57 = scmp.ne.s32.totalorder %s43, %s44
    %p58 = scmp.eq.s32.totalorder %s13, 1
    %p59 = por %p57, %p58
    %p61 = scmp.ne.s32.totalorder %s44, %s60
    %p62 = scmp.eq.s32.totalorder %s13, 0
    %p63 = por %p61, %p62
    %s64 = ssub.s32 %s14, %s33
    %s65 = ssub.s32 %s15, %s29
    %s66 = sor.u32 %s64, %s65
    %s67 = ssub.s32 %s16, %s25
    %s68 = sor.u32 %s66, %s67
    %p69 = scmp.eq.s32.totalorder %s68, 0
    %s71 = sadd.s32 %s70, 1
    %s72 = scalar_select %p69, %s70, %s71
    %p75 = pneg %p69
    %p76 = scmp.eq.s32.totalorder %s7, 1
    %p77 = por %p75, %p76
    %p78 = scmp.ne.s32.totalorder %s70, %s73
    %p79 = scmp.eq.s32.totalorder %s7, 0
    %p80 = por %p78, %p79
    %p81 = scmp.ne.s32.totalorder %s70, %s73
    %p82 = scmp.eq.s32.totalorder %s12, 1
    %p83 = por %p81, %p82
    %p84 = scmp.ne.s32.totalorder %s73, %s74
    %p85 = scmp.eq.s32.totalorder %s12, 0
    %p86 = por %p84, %p85
    %p87 = scmp.ne.s32.totalorder %s73, %s74
    %p88 = scmp.eq.s32.totalorder %s13, 1
    %p89 = por %p87, %p88
    %p91 = scmp.ne.s32.totalorder %s74, %s90
    %p92 = scmp.eq.s32.totalorder %s13, 0
    %p93 = por %p91, %p92
    %p94 = scmp.le.s32.totalorder 1, %s7
    %p95 = scmp.lt.s32.totalorder %s7, 3
    %p96 = pnand %p94, %p95
    %p97 = pneg %p96
    // Predicated region
    $region9: #{dwt.1} parent=5 // pred_check
      _
    $region10: #{dwt.1} parent=5 // pred_check_branch
      %99 = sbr.rel (%p96) target = $region12
    $region11: #{dwt.1} parent=5 // pred_region
      %s100 = ssub.s32 %s7, 1
    $region12: #{dwt.1} parent=5 // pred_fallthru
      _
    %p101 = scmp.lt.s32.totalorder %s7, 2
    // Predicated region
    $region13: #{dwt.1} parent=5 // pred_check
      %p102 = pneg %p101
    $region14: #{dwt.1} parent=5 // pred_check_branch
      %104 = sbr.rel (%p102) target = $region16
    $region15: #{dwt.1} parent=5 // pred_region
      // Predicated region
      $region17: #{dwt.1} parent=15 // pred_check
        %p105 = pneg %p50
      $region18: #{dwt.1} parent=15 // pred_check_branch
        %107 = sbr.rel (%p105) target = $region20
      $region19: #{dwt.1} parent=15 // pred_region
        %p108 = scmp.lt.s32.totalorder %s14, 1
        %s109 = scalar_select %p108, %s14, 1
        %p110 = scmp.lt.s32.totalorder %s15, 0
        %s111 = scalar_select %p110, %s15, 0
        %p112 = scmp.lt.s32.totalorder %s16, 0
        %s113 = scalar_select %p112, %s16, 0
        %s114 = sadd.s32 %s113, %s111
        %s115 = smul.addr %s109, 4
        %s116 = sadd.s32 %s114, %s115
        %s117 = smul.addr %s116, 4
        %s118 = scalar_lea.vmem %s0, %s117
      $region20: #{dwt.1} parent=15 // pred_fallthru
        _
    $region16: #{dwt.1} parent=5 // pred_fallthru
      _
    %p119 = scmp.le.s32.totalorder 1, %s7
    %p120 = scmp.lt.s32.totalorder %s7, 3
    %p121 = pnand %p119, %p120
    %p122 = pneg %p121
    // Predicated region
    $region21: #{dwt.1} parent=5 // pred_check
      _
    $region22: #{dwt.1} parent=5 // pred_check_branch
      %124 = sbr.rel (%p121) target = $region24
    $region23: #{dwt.1} parent=5 // pred_region
      %s125 = ssub.s32 %s7, 1
      %p126 = scmp.lt.s32.totalorder %s17, 1
      %s127 = scalar_select %p126, %s17, 1
      %p128 = scmp.lt.s32.totalorder %s18, 0
      %s129 = scalar_select %p128, %s18, 0
      %p130 = scmp.lt.s32.totalorder %s19, 0
      %s131 = scalar_select %p130, %s19, 0
      %s132 = sadd.s32 %s131, %s129
      %s133 = smul.addr %s127, 4
      %s134 = sadd.s32 %s132, %s133
      %s135 = smul.addr %s134, 4
      %s136 = scalar_lea.vmem %s0, %s135
      %p137 = pneg %p56
      %p138 = pneg %p53
      %p139 = pneg %p86
      %p140 = pneg %p83
      %p141 = scmp.lt.s32.totalorder %s17, 1
      %s142 = scalar_select %p141, %s17, 1
      %p143 = scmp.lt.s32.totalorder %s18, 0
      %s144 = scalar_select %p143, %s18, 0
      %p145 = scmp.lt.s32.totalorder %s19, 0
      %s146 = scalar_select %p145, %s19, 0
      %s147 = sadd.s32 %s146, %s144
      %s148 = smul.addr %s142, 4
      %s149 = sadd.s32 %s147, %s148
      %s150 = smul.addr %s149, 4
      %s151 = scalar_lea.vmem %s1, %s150
      %p152 = scmp.lt.s32.totalorder %s17, 1
      %s153 = scalar_select %p152, %s17, 1
      %p154 = scmp.lt.s32.totalorder %s18, 0
      %s155 = scalar_select %p154, %s18, 0
      %p156 = scmp.lt.s32.totalorder %s19, 0
      %s157 = scalar_select %p156, %s19, 0
      %s158 = sadd.s32 %s157, %s155
      %s159 = smul.addr %s153, 4
      %s160 = sadd.s32 %s158, %s159
      %s161 = smul.addr %s160, 4
      %s162 = scalar_lea.vmem %s0, %s161
      %p163 = scmp.lt.s32.totalorder %s17, 1
      %s164 = scalar_select %p163, %s17, 1
      %p165 = scmp.lt.s32.totalorder %s18, 0
      %s166 = scalar_select %p165, %s18, 0
      %p167 = scmp.lt.s32.totalorder %s19, 0
      %s168 = scalar_select %p167, %s19, 0
      %s169 = sadd.s32 %s168, %s166
      %s170 = smul.addr %s164, 4
      %s171 = sadd.s32 %s169, %s170
      %s172 = smul.addr %s171, 4
      %s173 = scalar_lea.vmem %s1, %s172
      %v174 = vld [vmem:[%s162] sm:$0xf]
      %s175 = scalar_lea.vmem %s162, 4
      %v176 = vld [vmem:[%s175] sm:$0xf]
      %s177 = scalar_lea.vmem %s162, 8
      %v178 = vld [vmem:[%s177] sm:$0xf]
      %s179 = scalar_lea.vmem %s162, 12
      %v180 = vld [vmem:[%s179] sm:$0xf]
      %v181 = vadd.f32 %v174, %v178
      %v182 = vadd.f32 %v176, %v180
      %v183 = vsub.f32 %v178, %v174
      %v184 = vsub.f32 %v180, %v176
      %v185 = vadd.f32 %v181, %v182
      %v186 = vmul.f32 %v185, 0.5
      %vm187 = vcmask 519168
      %188 = vst.msk [vmem:[%s173] sm:$0xf] %vm187, %v186
      %v189 = vsub.f32 %v182, %v181
      %v190 = vmul.f32 %v189, 0.5
      %s191 = scalar_lea.vmem %s173, 4
      %192 = vst.msk [vmem:[%s191] sm:$0xf] %vm187, %v190
      %v193 = vadd.f32 %v183, %v184
      %v194 = vmul.f32 %v193, 0.5
      %s195 = scalar_lea.vmem %s173, 8
      %196 = vst.msk [vmem:[%s195] sm:$0xf] %vm187, %v194
      %v197 = vsub.f32 %v184, %v183
      %v198 = vmul.f32 %v197, 0.5
      %s199 = scalar_lea.vmem %s173, 12
      %200 = vst.msk [vmem:[%s199] sm:$0xf] %vm187, %v198
      %p201 = scmp.lt.s32.totalorder %s17, 1
      %s202 = scalar_select %p201, %s17, 1
      %p203 = scmp.lt.s32.totalorder %s18, 0
      %s204 = scalar_select %p203, %s18, 0
      %p205 = scmp.lt.s32.totalorder %s19, 0
      %s206 = scalar_select %p205, %s19, 0
      %s207 = sadd.s32 %s206, %s204
      %s208 = smul.addr %s202, 4
      %s209 = sadd.s32 %s207, %s208
      %s210 = smul.addr %s209, 4
      %s211 = scalar_lea.vmem %s1, %s210
      // Predicated region
      $region25: #{dwt.1} parent=23 // pred_check
        %p212 = pneg %p83
      $region26: #{dwt.1} parent=23 // pred_check_branch
        %214 = sbr.rel (%p212) target = $region28
      $region27: #{dwt.1} parent=23 // pred_region
        _
      $region28: #{dwt.1} parent=23 // pred_fallthru
        _
    $region24: #{dwt.1} parent=5 // pred_fallthru
      _
    %p215 = scmp.le.s32.totalorder 2, %s7
    // Predicated region
    $region29: #{dwt.1} parent=5 // pred_check
      %p216 = pneg %p215
    $region30: #{dwt.1} parent=5 // pred_check_branch
      %218 = sbr.rel (%p216) target = $region32
    $region31: #{dwt.1} parent=5 // pred_region
      %s219 = ssub.s32 %s7, 2
      // Predicated region
      $region33: #{dwt.1} parent=31 // pred_check
        %p220 = pneg %p89
      $region34: #{dwt.1} parent=31 // pred_check_branch
        %222 = sbr.rel (%p220) target = $region36
      $region35: #{dwt.1} parent=31 // pred_region
        %p223 = scmp.lt.s32.totalorder %s20, 1
        %s224 = scalar_select %p223, %s20, 1
        %p225 = scmp.lt.s32.totalorder %s21, 0
        %s226 = scalar_select %p225, %s21, 0
        %p227 = scmp.lt.s32.totalorder %s22, 0
        %s228 = scalar_select %p227, %s22, 0
        %s229 = sadd.s32 %s228, %s226
        %s230 = smul.addr %s224, 4
        %s231 = sadd.s32 %s229, %s230
        %s232 = smul.addr %s231, 4
        %s233 = scalar_lea.vmem %s1, %s232
      $region36: #{dwt.1} parent=31 // pred_fallthru
        _
    $region32: #{dwt.1} parent=5 // pred_fallthru
      _
  $region6: #{dwt.1} parent=0 // loop_footer
    %s11 = sadd.s32 1, %s7
  $region7: #{dwt.1} parent=0 // loop_footer_branch
    %6 = sbr.rel target = $region3
  $region8: #{dwt.1} parent=0 // loop_exit
    _

</llo_original>
